<compile_context>
chip_gen: v5e
topology: v5e:2x2
jax: 0.10.0
libtpu: 0.0.40
codegen_flags: <defaults>
</compile_context>

<pallas_src>
import functools

import jax
import jax.numpy as jnp
from jax import lax
from jax.experimental import pallas as pl
from jax.experimental.pallas import tpu as pltpu

IN_FEATURES = 784
OUT_FEATURES = 10
OUT_PADDED = 128                      # lane-dense output block width (unmasked vst)

TILE_B_MAX_F32 = 2048                 # batch-tile caps (rows)
TILE_B_MAX_BF16 = 4096
MIN_GRID_STEPS = 4                    # keep >= 4 grid steps for v7x megacore + pipelining
VMEM_TILE_BUDGET = 32 * 1024 * 1024   # tiles + resident weights budget
VMEM_LIMIT_BYTES = 48 * 1024 * 1024   # raised scoped-VMEM limit (< v7x 64 MiB physical)


def two_layer_kernel(x_ref, w1_ref, b1_ref, w2_ref, b2_ref, o_ref, *, act_dtype):
    """One batch tile of the fused two-layer forward."""
    x = x_ref[...]        # (tile_b, 784)  x dtype (f32 or bf16)
    w1 = w1_ref[...]      # (H, 784)       x dtype, PyTorch (out, in) layout
    w2 = w2_ref[...]      # (128, H)       x dtype, rows >= 10 are zero
    b1 = b1_ref[...]      # (1, H)         f32
    b2 = b2_ref[...]      # (1, 128)       f32, cols >= 10 are zero

    # Layer 1: trans-B contraction is native on the MXU (no W1 transpose
    # materialized per grid step); f32 accumulation.
    z1 = lax.dot_general(x, w1, dimension_numbers=(((1,), (1,)), ((), ())),
                         preferred_element_type=jnp.float32)
    # tanh on the EUP; bf16 activation on v6e/v7x bf16 path, f32 on v5e.
    a1 = jnp.tanh((z1 + b1).astype(act_dtype))

    # Layer 2: lane-dense 128-wide output tile, f32 accumulation.
    y = lax.dot_general(a1.astype(w2.dtype), w2,
                        dimension_numbers=(((1,), (1,)), ((), ())),
                        preferred_element_type=jnp.float32)
    o_ref[...] = (y + b2).astype(o_ref.dtype)


def _device_is_v5e():
    try:
        kind = jax.devices()[0].device_kind.lower()
    except Exception:
        return False
    return ("v5 lite" in kind) or ("v5lite" in kind) or ("v5e" in kind)


def _choose_tile_b(batch, hidden, x_itemsize, out_itemsize):
    """Largest 8-aligned batch tile that keeps >=MIN_GRID_STEPS steps and fits VMEM."""
    tile_max = TILE_B_MAX_BF16 if x_itemsize <= 2 else TILE_B_MAX_F32
    # Resident single-buffered weights + double-buffered x / out tiles.
    resident = (hidden * IN_FEATURES + OUT_PADDED * hidden) * x_itemsize \
               + (hidden + OUT_PADDED) * 4
    per_row = 2 * IN_FEATURES * x_itemsize + 2 * OUT_PADDED * out_itemsize
    vmem_rows = max((VMEM_TILE_BUDGET - resident) // per_row, 8)
    vmem_rows = (vmem_rows // 8) * 8
    tile_b = ((pl.cdiv(batch, MIN_GRID_STEPS) + 7) // 8) * 8
    return int(max(8, min(tile_b, tile_max, vmem_rows)))


def _resident_spec(block_shape, single_buffer):
    """Constant-index resident operand; single-buffered when supported."""
    index_map = lambda i: (0, 0)
    if single_buffer:
        return pl.BlockSpec(block_shape, index_map, pipeline_mode=pl.Buffered(1))
    return pl.BlockSpec(block_shape, index_map)


def _build_call(batch, hidden, tile_b, out_dtype, act_dtype, single_buffer):
    return pl.pallas_call(
        functools.partial(two_layer_kernel, act_dtype=act_dtype),
        out_shape=jax.ShapeDtypeStruct((batch, OUT_PADDED), out_dtype),
        grid=(pl.cdiv(batch, tile_b),),
        in_specs=[
            pl.BlockSpec((tile_b, IN_FEATURES), lambda i: (i, 0)),       # x: batch-tiled
            _resident_spec((hidden, IN_FEATURES), single_buffer),        # W1: resident
            _resident_spec((1, hidden), single_buffer),                  # b1: resident
            _resident_spec((OUT_PADDED, hidden), single_buffer),         # W2 (padded)
            _resident_spec((1, OUT_PADDED), single_buffer),              # b2 (padded)
        ],
        out_specs=pl.BlockSpec((tile_b, OUT_PADDED), lambda i: (i, 0)),
        compiler_params=pltpu.CompilerParams(
            dimension_semantics=("parallel",),        # batch axis shards across v7x TCs
            vmem_limit_bytes=VMEM_LIMIT_BYTES,
        ),
    )


def two_layer_forward(x, w1, b1, w2, b2):
    """Forward of TwoLayerNetwork (PyTorch parameter layout).

    x:  (B, 784) float32 or bfloat16. The bf16 path is opt-in: pass x already
        stored in bf16 -- this wrapper never casts x (that would add a full
        HBM read+write pass over the dominant input).
    w1: (H, 784)   b1: (H,)   w2: (10, H)   b2: (10,)
    Returns (B, 10) in x.dtype.
    """
    batch = x.shape[0]
    hidden = w1.shape[0]
    assert x.shape[1] == IN_FEATURES and w1.shape == (hidden, IN_FEATURES)
    assert w2.shape == (OUT_FEATURES, hidden)
    assert b1.shape == (hidden,) and b2.shape == (OUT_FEATURES,)
    assert x.dtype in (jnp.float32, jnp.bfloat16)

    compute_dtype = x.dtype
    out_dtype = x.dtype
    act_dtype = (jnp.bfloat16
                 if (compute_dtype == jnp.bfloat16 and not _device_is_v5e())
                 else jnp.float32)

    # One-time (tiny) weight prep: keep (out, in) layout; zero-pad layer-2
    # out-features 10 -> 128 so the output store is unmasked and lane-dense.
    w1_c = w1.astype(compute_dtype)
    w2_p = jnp.zeros((OUT_PADDED, hidden), compute_dtype).at[:OUT_FEATURES].set(
        w2.astype(compute_dtype))
    b1_2d = b1.reshape(1, hidden).astype(jnp.float32)
    b2_p = jnp.zeros((1, OUT_PADDED), jnp.float32).at[0, :OUT_FEATURES].set(
        b2.astype(jnp.float32))

    tile_b = _choose_tile_b(batch, hidden,
                            jnp.dtype(compute_dtype).itemsize,
                            jnp.dtype(out_dtype).itemsize)

    # No wrapper-side pad: Pallas masks the ragged last batch block (OOB input
    # rows are undefined garbage but their outputs are never stored).
    # NOTE: for very large H (>= ~2-4K) a second "arbitrary" grid axis over H
    # chunks with an f32 accumulator would keep W1 out of resident VMEM.
    args = (x, w1_c, b1_2d, w2_p, b2_p)
    try:
        out = _build_call(batch, hidden, tile_b, out_dtype, act_dtype,
                          single_buffer=True)(*args)
    except Exception:
        # Fallback for jax versions without BlockSpec pipeline_mode / pl.Buffered.
        out = _build_call(batch, hidden, tile_b, out_dtype, act_dtype,
                          single_buffer=False)(*args)

    return out[:, :OUT_FEATURES]


if __name__ == "__main__":
    key = jax.random.PRNGKey(0)
    kx, kw1, kb1, kw2, kb2 = jax.random.split(key, 5)

    batch = 8
    num_hidden = 32

    x = jax.random.normal(kx, (batch, IN_FEATURES), dtype=jnp.float32)
    # Deterministic synthetic params (Xavier-uniform layer 1, nn.Linear-default layer 2).
    lim1 = (6.0 / (IN_FEATURES + num_hidden)) ** 0.5
    w1 = jax.random.uniform(kw1, (num_hidden, IN_FEATURES), jnp.float32, -lim1, lim1)
    blim = 1.0 / IN_FEATURES ** 0.5
    b1 = jax.random.uniform(kb1, (num_hidden,), jnp.float32, -blim, blim)
    lim2 = 1.0 / num_hidden ** 0.5
    w2 = jax.random.uniform(kw2, (OUT_FEATURES, num_hidden), jnp.float32, -lim2, lim2)
    b2 = jax.random.uniform(kb2, (OUT_FEATURES,), jnp.float32, -lim2, lim2)

    # Pure-JAX reference of the PyTorch forward.
    y_ref = jnp.tanh(x @ w1.T + b1) @ w2.T + b2

    # f32 path (strict check).
    y = jax.block_until_ready(two_layer_forward(x, w1, b1, w2, b2))
    assert y.shape == (batch, OUT_FEATURES) and y.dtype == jnp.float32
    assert jnp.allclose(y, y_ref, atol=1e-4, rtol=1e-4)

    # Opt-in bf16 path: caller supplies x already stored in bf16 (no wrapper cast).
    y_bf16 = jax.block_until_ready(
        two_layer_forward(x.astype(jnp.bfloat16), w1, b1, w2, b2))
    assert y_bf16.shape == (batch, OUT_FEATURES)
    assert jnp.allclose(y_bf16.astype(jnp.float32), y_ref, atol=1e-1, rtol=1e-1)

    print("KERNEL_OK")
</pallas_src>

<mosaic_0001>
module attributes {stable_mosaic.version = 11 : i64} {
  func.func @two_layer_kernel(%arg0: i32, %arg1: memref<8x784xf32, #tpu.memory_space<vmem>>, %arg2: memref<32x784xf32, #tpu.memory_space<vmem>>, %arg3: memref<1x32xf32, #tpu.memory_space<vmem>>, %arg4: memref<128x32xf32, #tpu.memory_space<vmem>>, %arg5: memref<1x128xf32, #tpu.memory_space<vmem>>, %arg6: memref<8x128xf32, #tpu.memory_space<vmem>>) attributes {dimension_semantics = [#tpu.dimension_semantics<parallel>], iteration_bounds = array<i64: 1>, scalar_prefetch = 0 : i64, scratch_operands = 0 : i64, tpu.core_type = #tpu.core_type<tc>, window_params = [{transform_indices = @transform_0, window_bounds = array<i64: 8, 784>}, {pipeline_mode = #tpu.pipeline_mode<synchronous>, transform_indices = @transform_1, window_bounds = array<i64: 32, 784>}, {pipeline_mode = #tpu.pipeline_mode<synchronous>, transform_indices = @transform_2, window_bounds = array<i64: 1, 32>}, {pipeline_mode = #tpu.pipeline_mode<synchronous>, transform_indices = @transform_3, window_bounds = array<i64: 128, 32>}, {pipeline_mode = #tpu.pipeline_mode<synchronous>, transform_indices = @transform_4, window_bounds = array<i64: 1, 128>}, {transform_indices = @transform_5, window_bounds = array<i64: 8, 128>}]} {
    %c0 = arith.constant 0 : index
    %c0_0 = arith.constant 0 : index
    %0 = vector.load %arg1[%c0, %c0_0] : memref<8x784xf32, #tpu.memory_space<vmem>>, vector<8x784xf32>
    %c0_1 = arith.constant 0 : index
    %c0_2 = arith.constant 0 : index
    %1 = vector.load %arg2[%c0_1, %c0_2] : memref<32x784xf32, #tpu.memory_space<vmem>>, vector<32x784xf32>
    %c0_3 = arith.constant 0 : index
    %c0_4 = arith.constant 0 : index
    %2 = vector.load %arg4[%c0_3, %c0_4] : memref<128x32xf32, #tpu.memory_space<vmem>>, vector<128x32xf32>
    %c0_5 = arith.constant 0 : index
    %c0_6 = arith.constant 0 : index
    %3 = vector.load %arg3[%c0_5, %c0_6] : memref<1x32xf32, #tpu.memory_space<vmem>>, vector<1x32xf32>
    %c0_7 = arith.constant 0 : index
    %c0_8 = arith.constant 0 : index
    %4 = vector.load %arg5[%c0_7, %c0_8] : memref<1x128xf32, #tpu.memory_space<vmem>>, vector<1x128xf32>
    %cst = arith.constant dense<0.000000e+00> : vector<8x32xf32>
    %5 = tpu.matmul %0, %1, %cst {dimension_numbers = #tpu.dot_dimension_numbers<[1], [1], [0], [0], [0, 0, 1, 0], [], []>} : vector<8x784xf32>, vector<32x784xf32>, vector<8x32xf32> -> vector<8x32xf32>
    %6 = vector.broadcast %3 : vector<1x32xf32> to vector<8x32xf32>
    %7 = arith.addf %5, %6 : vector<8x32xf32>
    %8 = math.tanh %7 : vector<8x32xf32>
    %cst_9 = arith.constant dense<0.000000e+00> : vector<8x128xf32>
    %9 = tpu.matmul %8, %2, %cst_9 {dimension_numbers = #tpu.dot_dimension_numbers<[1], [1], [0], [0], [0, 0, 1, 0], [], []>} : vector<8x32xf32>, vector<128x32xf32>, vector<8x128xf32> -> vector<8x128xf32>
    %10 = vector.broadcast %4 : vector<1x128xf32> to vector<8x128xf32>
    %11 = arith.addf %9, %10 : vector<8x128xf32>
    %c0_10 = arith.constant 0 : index
    %c0_11 = arith.constant 0 : index
    %12 = vector.load %arg6[%c0_10, %c0_11] : memref<8x128xf32, #tpu.memory_space<vmem>>, vector<8x128xf32>
    tpu.vector_store %arg6[%c0_10, %c0_11], %11 {strides = array<i32>} : memref<8x128xf32, #tpu.memory_space<vmem>>, vector<8x128xf32>,
    return
  }
  func.func @transform_0(%arg0: i32) -> (i32, i32) {
    %c0_i32 = arith.constant 0 : i32
    %c0_i32_0 = arith.constant 0 : i32
    return %arg0, %c0_i32 : i32, i32
  }
  func.func @transform_1(%arg0: i32) -> (i32, i32) {
    %c0_i32 = arith.constant 0 : i32
    %c0_i32_0 = arith.constant 0 : i32
    %c0_i32_1 = arith.constant 0 : i32
    return %c0_i32, %c0_i32_0 : i32, i32
  }
  func.func @transform_2(%arg0: i32) -> (i32, i32) {
    %c0_i32 = arith.constant 0 : i32
    %c0_i32_0 = arith.constant 0 : i32
    %c0_i32_1 = arith.constant 0 : i32
    return %c0_i32, %c0_i32_0 : i32, i32
  }
  func.func @transform_3(%arg0: i32) -> (i32, i32) {
    %c0_i32 = arith.constant 0 : i32
    %c0_i32_0 = arith.constant 0 : i32
    %c0_i32_1 = arith.constant 0 : i32
    return %c0_i32, %c0_i32_0 : i32, i32
  }
  func.func @transform_4(%arg0: i32) -> (i32, i32) {
    %c0_i32 = arith.constant 0 : i32
    %c0_i32_0 = arith.constant 0 : i32
    %c0_i32_1 = arith.constant 0 : i32
    return %c0_i32, %c0_i32_0 : i32, i32
  }
  func.func @transform_5(%arg0: i32) -> (i32, i32) {
    %c0_i32 = arith.constant 0 : i32
    %c0_i32_0 = arith.constant 0 : i32
    return %arg0, %c0_i32 : i32, i32
  }
}

module attributes {stable_mosaic.version = 11 : i64} {
  func.func @two_layer_kernel(%arg0: i32, %arg1: memref<8x784xf32, #tpu.memory_space<vmem>>, %arg2: memref<32x784xf32, #tpu.memory_space<vmem>>, %arg3: memref<1x32xf32, #tpu.memory_space<vmem>>, %arg4: memref<128x32xf32, #tpu.memory_space<vmem>>, %arg5: memref<1x128xf32, #tpu.memory_space<vmem>>, %arg6: memref<8x128xf32, #tpu.memory_space<vmem>>) attributes {dimension_semantics = [#tpu.dimension_semantics<parallel>], iteration_bounds = array<i64: 1>, scalar_prefetch = 0 : i64, scratch_operands = 0 : i64, tpu.core_type = #tpu.core_type<tc>, window_params = [{transform_indices = @transform_0, window_bounds = array<i64: 8, 784>}, {pipeline_mode = #tpu.pipeline_mode<synchronous>, transform_indices = @transform_1, window_bounds = array<i64: 32, 784>}, {pipeline_mode = #tpu.pipeline_mode<synchronous>, transform_indices = @transform_2, window_bounds = array<i64: 1, 32>}, {pipeline_mode = #tpu.pipeline_mode<synchronous>, transform_indices = @transform_3, window_bounds = array<i64: 128, 32>}, {pipeline_mode = #tpu.pipeline_mode<synchronous>, transform_indices = @transform_4, window_bounds = array<i64: 1, 128>}, {transform_indices = @transform_5, window_bounds = array<i64: 8, 128>}]} {
    %c0 = arith.constant 0 : index
    %c0_0 = arith.constant 0 : index
    %0 = vector.load %arg1[%c0, %c0_0] : memref<8x784xf32, #tpu.memory_space<vmem>>, vector<8x784xf32>
    %c0_1 = arith.constant 0 : index
    %c0_2 = arith.constant 0 : index
    %1 = vector.load %arg2[%c0_1, %c0_2] : memref<32x784xf32, #tpu.memory_space<vmem>>, vector<32x784xf32>
    %c0_3 = arith.constant 0 : index
    %c0_4 = arith.constant 0 : index
    %2 = vector.load %arg4[%c0_3, %c0_4] : memref<128x32xf32, #tpu.memory_space<vmem>>, vector<128x32xf32>
    %c0_5 = arith.constant 0 : index
    %c0_6 = arith.constant 0 : index
    %3 = vector.load %arg3[%c0_5, %c0_6] : memref<1x32xf32, #tpu.memory_space<vmem>>, vector<1x32xf32>
    %c0_7 = arith.constant 0 : index
    %c0_8 = arith.constant 0 : index
    %4 = vector.load %arg5[%c0_7, %c0_8] : memref<1x128xf32, #tpu.memory_space<vmem>>, vector<1x128xf32>
    %cst = arith.constant dense<0.000000e+00> : vector<8x32xf32>
    %5 = tpu.matmul %0, %1, %cst {dimension_numbers = #tpu.dot_dimension_numbers<[1], [1], [0], [0], [0, 0, 1, 0], [], []>} : vector<8x784xf32>, vector<32x784xf32>, vector<8x32xf32> -> vector<8x32xf32>
    %6 = vector.broadcast %3 : vector<1x32xf32> to vector<8x32xf32>
    %7 = arith.addf %5, %6 : vector<8x32xf32>
    %8 = math.tanh %7 : vector<8x32xf32>
    %cst_9 = arith.constant dense<0.000000e+00> : vector<8x128xf32>
    %9 = tpu.matmul %8, %2, %cst_9 {dimension_numbers = #tpu.dot_dimension_numbers<[1], [1], [0], [0], [0, 0, 1, 0], [], []>} : vector<8x32xf32>, vector<128x32xf32>, vector<8x128xf32> -> vector<8x128xf32>
    %10 = vector.broadcast %4 : vector<1x128xf32> to vector<8x128xf32>
    %11 = arith.addf %9, %10 : vector<8x128xf32>
    %c0_10 = arith.constant 0 : index
    %c0_11 = arith.constant 0 : index
    %12 = vector.load %arg6[%c0_10, %c0_11] : memref<8x128xf32, #tpu.memory_space<vmem>>, vector<8x128xf32>
    tpu.vector_store %arg6[%c0_10, %c0_11], %11 {strides = array<i32>} : memref<8x128xf32, #tpu.memory_space<vmem>>, vector<8x128xf32>,
    return
  }
  func.func @transform_0(%arg0: i32) -> (i32, i32) {
    %c0_i32 = arith.constant 0 : i32
    %c0_i32_0 = arith.constant 0 : i32
    return %arg0, %c0_i32 : i32, i32
  }
  func.func @transform_1(%arg0: i32) -> (i32, i32) {
    %c0_i32 = arith.constant 0 : i32
    %c0_i32_0 = arith.constant 0 : i32
    %c0_i32_1 = arith.constant 0 : i32
    return %c0_i32, %c0_i32_0 : i32, i32
  }
  func.func @transform_2(%arg0: i32) -> (i32, i32) {
    %c0_i32 = arith.constant 0 : i32
    %c0_i32_0 = arith.constant 0 : i32
    %c0_i32_1 = arith.constant 0 : i32
    return %c0_i32, %c0_i32_0 : i32, i32
  }
  func.func @transform_3(%arg0: i32) -> (i32, i32) {
    %c0_i32 = arith.constant 0 : i32
    %c0_i32_0 = arith.constant 0 : i32
    %c0_i32_1 = arith.constant 0 : i32
    return %c0_i32, %c0_i32_0 : i32, i32
  }
  func.func @transform_4(%arg0: i32) -> (i32, i32) {
    %c0_i32 = arith.constant 0 : i32
    %c0_i32_0 = arith.constant 0 : i32
    %c0_i32_1 = arith.constant 0 : i32
    return %c0_i32, %c0_i32_0 : i32, i32
  }
  func.func @transform_5(%arg0: i32) -> (i32, i32) {
    %c0_i32 = arith.constant 0 : i32
    %c0_i32_0 = arith.constant 0 : i32
    return %arg0, %c0_i32 : i32, i32
  }
}

</mosaic_0001>

<llo_original>
// kernel: tpu_custom_call.1
$region0: #{tpu_custom_call.1}
  #allocation0 [shape = 'u32[]', space=smem, size = 0x4, offset = 0x4, fixed_abs, tag = 'smem constant byte address 0x4 - core index']
  #allocation1 [shape = 'u32[72,128]{1,0:T(1,128)}', space=vmem, size = 0x9000, scoped, tag = 'internal scratch']
  %s0 = inlined_call_operand.vmem [shape: f32[8,784], index: 0, kind: input, shape index: {}]
  %s1 = inlined_call_operand.hbm [shape: f32[32,784], index: 1, kind: input, shape index: {}]
  %s2 = inlined_call_operand.vmem [shape: f32[1,32], index: 2, kind: input, shape index: {}]
  %s3 = inlined_call_operand.vmem [shape: f32[128,32], index: 3, kind: input, shape index: {}]
  %s4 = inlined_call_operand.vmem [shape: f32[1,128], index: 4, kind: input, shape index: {}]
  %s5 = inlined_call_operand.hbm [shape: f32[8,128], index: 5, kind: output, shape index: {}]
  %s6 = sld [smem:[#allocation0]]
  $region34: #{tpu_custom_call.1} parent=0
    _
  %s8 = ssub.s32 1, %s6
  %s9 = scalar_select 0, %s8, %s6
  $region1: #{tpu_custom_call.1} parent=0
    #allocation2 [shape = 'u8[114688]{0}', space=vmem, size = 0x1c000, scoped, tag = 'input window, operand 1, single buffered']
    #allocation3 [shape = 's32[1]{0}', space=sflag, size = 0x4, scoped, tag = 'scoped memory for tpu_custom_call.1']
    #allocation4 [shape = 's32[1]{0}', space=sflag, size = 0x4, scoped, tag = 'scoped memory for tpu_custom_call.1']
    #allocation5 [shape = 'u8[4096]{0}', space=vmem, size = 0x1000, scoped, tag = 'output window, operand 0, single buffered']
    %10 = vsyncpa [#allocation3], 0
    %11 = vsyncpa [#allocation4], 0
    // Predicated region
    $region2: #{tpu_custom_call.1} parent=1 // pred_check
      _
    $region3: #{tpu_custom_call.1} parent=1 // pred_check_branch
      %13 = sbr.rel (0) target = $region5
    $region4: #{tpu_custom_call.1} parent=1 // pred_region
      _
    $region5: #{tpu_custom_call.1} parent=1 // pred_fallthru
      _
    // Predicated region
    $region6: #{tpu_custom_call.1} parent=1 // pred_check
      _
    $region7: #{tpu_custom_call.1} parent=1 // pred_check_branch
      %15 = sbr.rel (0) target = $region9
    $region8: #{tpu_custom_call.1} parent=1 // pred_region
      %17 = vsyncadd [#allocation3], 0
      %s18 = sshll.u32 %s1, 4
      %s19 = int_to_ptr.hbm [resolvable:$true] %s18
      %s20 = sshll.u32 [#allocation2], 4
      %s21 = int_to_ptr.vmem [resolvable:$true] %s20
      %26 = dma.hbm_to_vmem [thread:$0]  %s19, 3584, %s21, [#allocation3], 896, 896, 56
    $region9: #{tpu_custom_call.1} parent=1 // pred_fallthru
      _
    // Predicated region
    $region10: #{tpu_custom_call.1} parent=1 // pred_check
      _
    $region11: #{tpu_custom_call.1} parent=1 // pred_check_branch
      %28 = sbr.rel (0) target = $region13
    $region12: #{tpu_custom_call.1} parent=1 // pred_region
      _
    $region13: #{tpu_custom_call.1} parent=1 // pred_fallthru
      _
    // Predicated region
    $region14: #{tpu_custom_call.1} parent=1 // pred_check
      _
    $region15: #{tpu_custom_call.1} parent=1 // pred_check_branch
      %30 = sbr.rel (0) target = $region17
    $region16: #{tpu_custom_call.1} parent=1 // pred_region
      _
    $region17: #{tpu_custom_call.1} parent=1 // pred_fallthru
      _
    // Predicated region
    $region18: #{tpu_custom_call.1} parent=1 // pred_check
      _
    $region19: #{tpu_custom_call.1} parent=1 // pred_check_branch
      %32 = sbr.rel (0) target = $region21
    $region20: #{tpu_custom_call.1} parent=1 // pred_region
      _
    $region21: #{tpu_custom_call.1} parent=1 // pred_fallthru
      _
    // Predicated region
    $region22: #{tpu_custom_call.1} parent=1 // pred_check
      _
    $region23: #{tpu_custom_call.1} parent=1 // pred_check_branch
      %34 = sbr.rel (0) target = $region25
    $region24: #{tpu_custom_call.1} parent=1 // pred_region
      %36 = dma.done [#allocation3], 3584
    $region25: #{tpu_custom_call.1} parent=1 // pred_fallthru
      _
    %v37 = vld [vmem:[%s0] sm:$0xff]
    %v38 = vld [vmem:[%s0 + $0x8] sm:$0xff]
    %v39 = vld [vmem:[%s0 + $0x10] sm:$0xff]
    %v40 = vld [vmem:[%s0 + $0x18] sm:$0xff]
    %v41 = vld [vmem:[%s0 + $0x20] sm:$0xff]
    %v42 = vld [vmem:[%s0 + $0x28] sm:$0xff]
    %v43 = vld [vmem:[%s0 + $0x30] sm:$0xff]
    %v44 = vld [vmem:[#allocation2] sm:$0xff]
    %v45 = vld [vmem:[#allocation2 + $0x8] sm:$0xff]
    %v46 = vld [vmem:[#allocation2 + $0x10] sm:$0xff]
    %v47 = vld [vmem:[#allocation2 + $0x18] sm:$0xff]
    %v48 = vld [vmem:[#allocation2 + $0x20] sm:$0xff]
    %v49 = vld [vmem:[#allocation2 + $0x28] sm:$0xff]
    %v50 = vld [vmem:[#allocation2 + $0x30] sm:$0xff]
    %v51 = vld [vmem:[#allocation2 + $0x38] sm:$0xff]
    %v52 = vld [vmem:[#allocation2 + $0x40] sm:$0xff]
    %v53 = vld [vmem:[#allocation2 + $0x48] sm:$0xff]
    %v54 = vld [vmem:[#allocation2 + $0x50] sm:$0xff]
    %v55 = vld [vmem:[#allocation2 + $0x58] sm:$0xff]
    %v56 = vld [vmem:[#allocation2 + $0x60] sm:$0xff]
    %v57 = vld [vmem:[#allocation2 + $0x68] sm:$0xff]
    %v58 = vld [vmem:[#allocation2 + $0x70] sm:$0xff]
    %v59 = vld [vmem:[#allocation2 + $0x78] sm:$0xff]
    %v60 = vld [vmem:[#allocation2 + $0x80] sm:$0xff]
    %v61 = vld [vmem:[#allocation2 + $0x88] sm:$0xff]
    %v62 = vld [vmem:[#allocation2 + $0x90] sm:$0xff]
    %v63 = vld [vmem:[#allocation2 + $0x98] sm:$0xff]
    %v64 = vld [vmem:[#allocation2 + $0xa0] sm:$0xff]
    %v65 = vld [vmem:[#allocation2 + $0xa8] sm:$0xff]
    %v66 = vld [vmem:[#allocation2 + $0xb0] sm:$0xff]
    %v67 = vld [vmem:[#allocation2 + $0xb8] sm:$0xff]
    %v68 = vld [vmem:[#allocation2 + $0xc0] sm:$0xff]
    %v69 = vld [vmem:[#allocation2 + $0xc8] sm:$0xff]
    %v70 = vld [vmem:[#allocation2 + $0xd0] sm:$0xff]
    %v71 = vld [vmem:[#allocation2 + $0xd8] sm:$0xff]
    %v72 = vld [vmem:[%s3] sm:$0xff]
    %v73 = vld [vmem:[%s3 + $0x8] sm:$0xff]
    %v74 = vld [vmem:[%s3 + $0x10] sm:$0xff]
    %v75 = vld [vmem:[%s3 + $0x18] sm:$0xff]
    %v76 = vld [vmem:[%s3 + $0x20] sm:$0xff]
    %v77 = vld [vmem:[%s3 + $0x28] sm:$0xff]
    %v78 = vld [vmem:[%s3 + $0x30] sm:$0xff]
    %v79 = vld [vmem:[%s3 + $0x38] sm:$0xff]
    %v80 = vld [vmem:[%s3 + $0x40] sm:$0xff]
    %v81 = vld [vmem:[%s3 + $0x48] sm:$0xff]
    %v82 = vld [vmem:[%s3 + $0x50] sm:$0xff]
    %v83 = vld [vmem:[%s3 + $0x58] sm:$0xff]
    %v84 = vld [vmem:[%s3 + $0x60] sm:$0xff]
    %v85 = vld [vmem:[%s3 + $0x68] sm:$0xff]
    %v86 = vld [vmem:[%s3 + $0x70] sm:$0xff]
    %v87 = vld [vmem:[%s3 + $0x78] sm:$0xff]
    %v88 = vld [vmem:[%s2] sm:$0x1]
    %v89 = vld [vmem:[%s4] sm:$0x1]
    %v91 = vperm.slane %v88, 0
    %vm93 = vcmask 130048
    %v95 = vsel %vm93, %v43, 0
    %v98 = vsel %vm93, %v50, 0
    %v101 = vsel %vm93, %v57, 0
    %v104 = vsel %vm93, %v64, 0
    %v107 = vsel %vm93, %v71, 0
    %109 = vmatpush.xpose.msra.mxu0 0.0
    %110 = vmatpush.xpose.msra.mxu0 0.0
    %111 = vmatpush.xpose.msra.mxu0 0.0
    %112 = vmatpush.xpose.msra.mxu0 0.0
    %113 = vmatpush.xpose.msra.mxu0 0.0
    %114 = vmatpush.xpose.msra.mxu0 0.0
    %115 = vmatpush.xpose.msra.mxu0 0.0
    %116 = vmatpush.xpose.msra.mxu0 0.0
    %117 = vmatpush.xpose.msra.mxu0 0.0
    %118 = vmatpush.xpose.msra.mxu0 0.0
    %119 = vmatpush.xpose.msra.mxu0 0.0
    %120 = vmatpush.xpose.msra.mxu0 0.0
    %121 = vmatpush.xpose.msra.mxu0 %v65
    %122 = vmatpush.xpose.msra.mxu0 %v58
    %123 = vmatpush.xpose.msra.mxu0 %v51
    %124 = vmatpush.xpose.msra.mxu0 %v44
    %125 = vmatmul.f32.gmra.mxu0 %v37
    %v126 = vpop.f32.mrf.mxu0
    %v127 = vadd.f32 %v91, %v126
    %128 = vdwg.mxu0
    %129 = vmatpush.xpose.msra.mxu0 0.0
    %130 = vmatpush.xpose.msra.mxu0 0.0
    %131 = vmatpush.xpose.msra.mxu0 0.0
    %132 = vmatpush.xpose.msra.mxu0 0.0
    %133 = vmatpush.xpose.msra.mxu0 0.0
    %134 = vmatpush.xpose.msra.mxu0 0.0
    %135 = vmatpush.xpose.msra.mxu0 0.0
    %136 = vmatpush.xpose.msra.mxu0 0.0
    %137 = vmatpush.xpose.msra.mxu0 0.0
    %138 = vmatpush.xpose.msra.mxu0 0.0
    %139 = vmatpush.xpose.msra.mxu0 0.0
    %140 = vmatpush.xpose.msra.mxu0 0.0
    %141 = vmatpush.xpose.msra.mxu0 %v66
    %142 = vmatpush.xpose.msra.mxu0 %v59
    %143 = vmatpush.xpose.msra.mxu0 %v52
    %144 = vmatpush.xpose.msra.mxu0 %v45
    %145 = vmatmul.f32.gmra.mxu0 %v38
    %v146 = vpop.f32.mrf.mxu0
    %v147 = vadd.f32 %v127, %v146
    %148 = vdwg.mxu0
    %149 = vmatpush.xpose.msra.mxu0 0.0
    %150 = vmatpush.xpose.msra.mxu0 0.0
    %151 = vmatpush.xpose.msra.mxu0 0.0
    %152 = vmatpush.xpose.msra.mxu0 0.0
    %153 = vmatpush.xpose.msra.mxu0 0.0
    %154 = vmatpush.xpose.msra.mxu0 0.0
    %155 = vmatpush.xpose.msra.mxu0 0.0
    %156 = vmatpush.xpose.msra.mxu0 0.0
    %157 = vmatpush.xpose.msra.mxu0 0.0
    %158 = vmatpush.xpose.msra.mxu0 0.0
    %159 = vmatpush.xpose.msra.mxu0 0.0
    %160 = vmatpush.xpose.msra.mxu0 0.0
    %161 = vmatpush.xpose.msra.mxu0 %v67
    %162 = vmatpush.xpose.msra.mxu0 %v60
    %163 = vmatpush.xpose.msra.mxu0 %v53
    %164 = vmatpush.xpose.msra.mxu0 %v46
    %165 = vmatmul.f32.gmra.mxu0 %v39
    %v166 = vpop.f32.mrf.mxu0
    %v167 = vadd.f32 %v147, %v166
    %168 = vdwg.mxu0
    %169 = vmatpush.xpose.msra.mxu0 0.0
    %170 = vmatpush.xpose.msra.mxu0 0.0
    %171 = vmatpush.xpose.msra.mxu0 0.0
    %172 = vmatpush.xpose.msra.mxu0 0.0
    %173 = vmatpush.xpose.msra.mxu0 0.0
    %174 = vmatpush.xpose.msra.mxu0 0.0
    %175 = vmatpush.xpose.msra.mxu0 0.0
    %176 = vmatpush.xpose.msra.mxu0 0.0
    %177 = vmatpush.xpose.msra.mxu0 0.0
    %178 = vmatpush.xpose.msra.mxu0 0.0
    %179 = vmatpush.xpose.msra.mxu0 0.0
    %180 = vmatpush.xpose.msra.mxu0 0.0
    %181 = vmatpush.xpose.msra.mxu0 %v68
    %182 = vmatpush.xpose.msra.mxu0 %v61
    %183 = vmatpush.xpose.msra.mxu0 %v54
    %184 = vmatpush.xpose.msra.mxu0 %v47
    %185 = vmatmul.f32.gmra.mxu0 %v40
    %v186 = vpop.f32.mrf.mxu0
    %v187 = vadd.f32 %v167, %v186
    %188 = vdwg.mxu0
    %189 = vmatpush.xpose.msra.mxu0 0.0
    %190 = vmatpush.xpose.msra.mxu0 0.0
    %191 = vmatpush.xpose.msra.mxu0 0.0
    %192 = vmatpush.xpose.msra.mxu0 0.0
    %193 = vmatpush.xpose.msra.mxu0 0.0
    %194 = vmatpush.xpose.msra.mxu0 0.0
    %195 = vmatpush.xpose.msra.mxu0 0.0
    %196 = vmatpush.xpose.msra.mxu0 0.0
    %197 = vmatpush.xpose.msra.mxu0 0.0
    %198 = vmatpush.xpose.msra.mxu0 0.0
    %199 = vmatpush.xpose.msra.mxu0 0.0
    %200 = vmatpush.xpose.msra.mxu0 0.0
    %201 = vmatpush.xpose.msra.mxu0 %v69
    %202 = vmatpush.xpose.msra.mxu0 %v62
    %203 = vmatpush.xpose.msra.mxu0 %v55
    %204 = vmatpush.xpose.msra.mxu0 %v48
    %205 = vmatmul.f32.gmra.mxu0 %v41
    %v206 = vpop.f32.mrf.mxu0
    %v207 = vadd.f32 %v187, %v206
    %208 = vdwg.mxu0
    %209 = vmatpush.xpose.msra.mxu0 0.0
    %210 = vmatpush.xpose.msra.mxu0 0.0
    %211 = vmatpush.xpose.msra.mxu0 0.0
    %212 = vmatpush.xpose.msra.mxu0 0.0
    %213 = vmatpush.xpose.msra.mxu0 0.0
    %214 = vmatpush.xpose.msra.mxu0 0.0
    %215 = vmatpush.xpose.msra.mxu0 0.0
    %216 = vmatpush.xpose.msra.mxu0 0.0
    %217 = vmatpush.xpose.msra.mxu0 0.0
    %218 = vmatpush.xpose.msra.mxu0 0.0
    %219 = vmatpush.xpose.msra.mxu0 0.0
    %220 = vmatpush.xpose.msra.mxu0 0.0
    %221 = vmatpush.xpose.msra.mxu0 %v70
    %222 = vmatpush.xpose.msra.mxu0 %v63
    %223 = vmatpush.xpose.msra.mxu0 %v56
    %224 = vmatpush.xpose.msra.mxu0 %v49
    %225 = vmatmul.f32.gmra.mxu0 %v42
    %v226 = vpop.f32.mrf.mxu0
    %v227 = vadd.f32 %v207, %v226
    %228 = vdwg.mxu0
    %229 = vmatpush.xpose.msra.mxu0 0.0
    %230 = vmatpush.xpose.msra.mxu0 0.0
    %231 = vmatpush.xpose.msra.mxu0 0.0
    %232 = vmatpush.xpose.msra.mxu0 0.0
    %233 = vmatpush.xpose.msra.mxu0 0.0
    %234 = vmatpush.xpose.msra.mxu0 0.0
    %235 = vmatpush.xpose.msra.mxu0 0.0
    %236 = vmatpush.xpose.msra.mxu0 0.0
    %237 = vmatpush.xpose.msra.mxu0 0.0
    %238 = vmatpush.xpose.msra.mxu0 0.0
    %239 = vmatpush.xpose.msra.mxu0 0.0
    %240 = vmatpush.xpose.msra.mxu0 0.0
    %241 = vmatpush.xpose.msra.mxu0 %v107
    %242 = vmatpush.xpose.msra.mxu0 %v104
    %243 = vmatpush.xpose.msra.mxu0 %v101
    %244 = vmatpush.xpose.msra.mxu0 %v98
    %245 = vmatmul.f32.gmra.mxu0 %v95
    %v246 = vpop.f32.mrf.mxu0
    %v247 = vadd.f32 %v227, %v246
    %248 = vdwg.mxu0
    %v249 = vtanh.pop %v247
    %v251 = vperm.slane %v89, 0
    %vm253 = vcmask 261120
    %v255 = vsel %vm253, %v249, 0
    %v258 = vsel %vm253, %v72, 0
    %v261 = vsel %vm253, %v73, 0
    %v264 = vsel %vm253, %v74, 0
    %v267 = vsel %vm253, %v75, 0
    %v270 = vsel %vm253, %v76, 0
    %v273 = vsel %vm253, %v77, 0
    %v276 = vsel %vm253, %v78, 0
    %v279 = vsel %vm253, %v79, 0
    %v282 = vsel %vm253, %v80, 0
    %v285 = vsel %vm253, %v81, 0
    %v288 = vsel %vm253, %v82, 0
    %v291 = vsel %vm253, %v83, 0
    %v294 = vsel %vm253, %v84, 0
    %v297 = vsel %vm253, %v85, 0
    %v300 = vsel %vm253, %v86, 0
    %v303 = vsel %vm253, %v87, 0
    %305 = vmatpush.xpose.msra.mxu0 %v303
    %306 = vmatpush.xpose.msra.mxu0 %v300
    %307 = vmatpush.xpose.msra.mxu0 %v297
    %308 = vmatpush.xpose.msra.mxu0 %v294
    %309 = vmatpush.xpose.msra.mxu0 %v291
    %310 = vmatpush.xpose.msra.mxu0 %v288
    %311 = vmatpush.xpose.msra.mxu0 %v285
    %312 = vmatpush.xpose.msra.mxu0 %v282
    %313 = vmatpush.xpose.msra.mxu0 %v279
    %314 = vmatpush.xpose.msra.mxu0 %v276
    %315 = vmatpush.xpose.msra.mxu0 %v273
    %316 = vmatpush.xpose.msra.mxu0 %v270
    %317 = vmatpush.xpose.msra.mxu0 %v267
    %318 = vmatpush.xpose.msra.mxu0 %v264
    %319 = vmatpush.xpose.msra.mxu0 %v261
    %320 = vmatpush.xpose.msra.mxu0 %v258
    %321 = vmatmul.f32.gmra.mxu0 %v255
    %v322 = vpop.f32.mrf.mxu0
    %v323 = vadd.f32 %v251, %v322
    %324 = vdwg.mxu0
    %325 = vst [vmem:[#allocation5] sm:$0xff] %v323
    // Predicated region
    $region26: #{tpu_custom_call.1} parent=1 // pred_check
      _
    $region27: #{tpu_custom_call.1} parent=1 // pred_check_branch
      %327 = sbr.rel (0) target = $region29
    $region28: #{tpu_custom_call.1} parent=1 // pred_region
      %329 = vsyncadd [#allocation4], 0
      %s331 = sshll.u32 [#allocation5], 4
      %s332 = int_to_ptr.vmem [resolvable:$true] %s331
      %s333 = sshll.u32 %s5, 4
      %s334 = int_to_ptr.hbm [resolvable:$true] %s333
      %336 = dma.vmem_to_hbm [thread:$0]  %s332, 128, %s334, [#allocation4]
    $region29: #{tpu_custom_call.1} parent=1 // pred_fallthru
      _
    // Predicated region
    $region30: #{tpu_custom_call.1} parent=1 // pred_check
      _
    $region31: #{tpu_custom_call.1} parent=1 // pred_check_branch
      %338 = sbr.rel (0) target = $region33
    $region32: #{tpu_custom_call.1} parent=1 // pred_region
      %340 = dma.done [#allocation4], 128
    $region33: #{tpu_custom_call.1} parent=1 // pred_fallthru
      _
    %341 = vsyncpa [#allocation3], 1
    %342 = vsyncpa [#allocation4], 1

// kernel: tpu_custom_call.1
$region0: #{tpu_custom_call.1}
  #allocation0 [shape = 'u32[]', space=smem, size = 0x4, offset = 0x4, fixed_abs, tag = 'smem constant byte address 0x4 - core index']
  #allocation1 [shape = 'u32[72,128]{1,0:T(1,128)}', space=vmem, size = 0x9000, scoped, tag = 'internal scratch']
  %s0 = inlined_call_operand.vmem [shape: f32[8,784], index: 0, kind: input, shape index: {}]
  %s1 = inlined_call_operand.hbm [shape: f32[32,784], index: 1, kind: input, shape index: {}]
  %s2 = inlined_call_operand.vmem [shape: f32[1,32], index: 2, kind: input, shape index: {}]
  %s3 = inlined_call_operand.vmem [shape: f32[128,32], index: 3, kind: input, shape index: {}]
  %s4 = inlined_call_operand.vmem [shape: f32[1,128], index: 4, kind: input, shape index: {}]
  %s5 = inlined_call_operand.hbm [shape: f32[8,128], index: 5, kind: output, shape index: {}]
  %s6 = sld [smem:[#allocation0]]
  $region34: #{tpu_custom_call.1} parent=0
    _
  %s8 = ssub.s32 1, %s6
  %s9 = scalar_select 0, %s8, %s6
  $region1: #{tpu_custom_call.1} parent=0
    #allocation2 [shape = 'u8[114688]{0}', space=vmem, size = 0x1c000, scoped, tag = 'input window, operand 1, single buffered']
    #allocation3 [shape = 's32[1]{0}', space=sflag, size = 0x4, scoped, tag = 'scoped memory for tpu_custom_call.1']
    #allocation4 [shape = 's32[1]{0}', space=sflag, size = 0x4, scoped, tag = 'scoped memory for tpu_custom_call.1']
    #allocation5 [shape = 'u8[4096]{0}', space=vmem, size = 0x1000, scoped, tag = 'output window, operand 0, single buffered']
    %10 = vsyncpa [#allocation3], 0
    %11 = vsyncpa [#allocation4], 0
    // Predicated region
    $region2: #{tpu_custom_call.1} parent=1 // pred_check
      _
    $region3: #{tpu_custom_call.1} parent=1 // pred_check_branch
      %13 = sbr.rel (0) target = $region5
    $region4: #{tpu_custom_call.1} parent=1 // pred_region
      _
    $region5: #{tpu_custom_call.1} parent=1 // pred_fallthru
      _
    // Predicated region
    $region6: #{tpu_custom_call.1} parent=1 // pred_check
      _
    $region7: #{tpu_custom_call.1} parent=1 // pred_check_branch
      %15 = sbr.rel (0) target = $region9
    $region8: #{tpu_custom_call.1} parent=1 // pred_region
      %17 = vsyncadd [#allocation3], 0
      %s18 = sshll.u32 %s1, 4
      %s19 = int_to_ptr.hbm [resolvable:$true] %s18
      %s20 = sshll.u32 [#allocation2], 4
      %s21 = int_to_ptr.vmem [resolvable:$true] %s20
      %26 = dma.hbm_to_vmem [thread:$0]  %s19, 3584, %s21, [#allocation3], 896, 896, 56
    $region9: #{tpu_custom_call.1} parent=1 // pred_fallthru
      _
    // Predicated region
    $region10: #{tpu_custom_call.1} parent=1 // pred_check
      _
    $region11: #{tpu_custom_call.1} parent=1 // pred_check_branch
      %28 = sbr.rel (0) target = $region13
    $region12: #{tpu_custom_call.1} parent=1 // pred_region
      _
    $region13: #{tpu_custom_call.1} parent=1 // pred_fallthru
      _
    // Predicated region
    $region14: #{tpu_custom_call.1} parent=1 // pred_check
      _
    $region15: #{tpu_custom_call.1} parent=1 // pred_check_branch
      %30 = sbr.rel (0) target = $region17
    $region16: #{tpu_custom_call.1} parent=1 // pred_region
      _
    $region17: #{tpu_custom_call.1} parent=1 // pred_fallthru
      _
    // Predicated region
    $region18: #{tpu_custom_call.1} parent=1 // pred_check
      _
    $region19: #{tpu_custom_call.1} parent=1 // pred_check_branch
      %32 = sbr.rel (0) target = $region21
    $region20: #{tpu_custom_call.1} parent=1 // pred_region
      _
    $region21: #{tpu_custom_call.1} parent=1 // pred_fallthru
      _
    // Predicated region
    $region22: #{tpu_custom_call.1} parent=1 // pred_check
      _
    $region23: #{tpu_custom_call.1} parent=1 // pred_check_branch
      %34 = sbr.rel (0) target = $region25
    $region24: #{tpu_custom_call.1} parent=1 // pred_region
      %36 = dma.done [#allocation3], 3584
    $region25: #{tpu_custom_call.1} parent=1 // pred_fallthru
      _
    %v37 = vld [vmem:[%s0] sm:$0xff]
    %v38 = vld [vmem:[%s0 + $0x8] sm:$0xff]
    %v39 = vld [vmem:[%s0 + $0x10] sm:$0xff]
    %v40 = vld [vmem:[%s0 + $0x18] sm:$0xff]
    %v41 = vld [vmem:[%s0 + $0x20] sm:$0xff]
    %v42 = vld [vmem:[%s0 + $0x28] sm:$0xff]
    %v43 = vld [vmem:[%s0 + $0x30] sm:$0xff]
    %v44 = vld [vmem:[#allocation2] sm:$0xff]
    %v45 = vld [vmem:[#allocation2 + $0x8] sm:$0xff]
    %v46 = vld [vmem:[#allocation2 + $0x10] sm:$0xff]
    %v47 = vld [vmem:[#allocation2 + $0x18] sm:$0xff]
    %v48 = vld [vmem:[#allocation2 + $0x20] sm:$0xff]
    %v49 = vld [vmem:[#allocation2 + $0x28] sm:$0xff]
    %v50 = vld [vmem:[#allocation2 + $0x30] sm:$0xff]
    %v51 = vld [vmem:[#allocation2 + $0x38] sm:$0xff]
    %v52 = vld [vmem:[#allocation2 + $0x40] sm:$0xff]
    %v53 = vld [vmem:[#allocation2 + $0x48] sm:$0xff]
    %v54 = vld [vmem:[#allocation2 + $0x50] sm:$0xff]
    %v55 = vld [vmem:[#allocation2 + $0x58] sm:$0xff]
    %v56 = vld [vmem:[#allocation2 + $0x60] sm:$0xff]
    %v57 = vld [vmem:[#allocation2 + $0x68] sm:$0xff]
    %v58 = vld [vmem:[#allocation2 + $0x70] sm:$0xff]
    %v59 = vld [vmem:[#allocation2 + $0x78] sm:$0xff]
    %v60 = vld [vmem:[#allocation2 + $0x80] sm:$0xff]
    %v61 = vld [vmem:[#allocation2 + $0x88] sm:$0xff]
    %v62 = vld [vmem:[#allocation2 + $0x90] sm:$0xff]
    %v63 = vld [vmem:[#allocation2 + $0x98] sm:$0xff]
    %v64 = vld [vmem:[#allocation2 + $0xa0] sm:$0xff]
    %v65 = vld [vmem:[#allocation2 + $0xa8] sm:$0xff]
    %v66 = vld [vmem:[#allocation2 + $0xb0] sm:$0xff]
    %v67 = vld [vmem:[#allocation2 + $0xb8] sm:$0xff]
    %v68 = vld [vmem:[#allocation2 + $0xc0] sm:$0xff]
    %v69 = vld [vmem:[#allocation2 + $0xc8] sm:$0xff]
    %v70 = vld [vmem:[#allocation2 + $0xd0] sm:$0xff]
    %v71 = vld [vmem:[#allocation2 + $0xd8] sm:$0xff]
    %v72 = vld [vmem:[%s3] sm:$0xff]
    %v73 = vld [vmem:[%s3 + $0x8] sm:$0xff]
    %v74 = vld [vmem:[%s3 + $0x10] sm:$0xff]
    %v75 = vld [vmem:[%s3 + $0x18] sm:$0xff]
    %v76 = vld [vmem:[%s3 + $0x20] sm:$0xff]
    %v77 = vld [vmem:[%s3 + $0x28] sm:$0xff]
    %v78 = vld [vmem:[%s3 + $0x30] sm:$0xff]
    %v79 = vld [vmem:[%s3 + $0x38] sm:$0xff]
    %v80 = vld [vmem:[%s3 + $0x40] sm:$0xff]
    %v81 = vld [vmem:[%s3 + $0x48] sm:$0xff]
    %v82 = vld [vmem:[%s3 + $0x50] sm:$0xff]
    %v83 = vld [vmem:[%s3 + $0x58] sm:$0xff]
    %v84 = vld [vmem:[%s3 + $0x60] sm:$0xff]
    %v85 = vld [vmem:[%s3 + $0x68] sm:$0xff]
    %v86 = vld [vmem:[%s3 + $0x70] sm:$0xff]
    %v87 = vld [vmem:[%s3 + $0x78] sm:$0xff]
    %v88 = vld [vmem:[%s2] sm:$0x1]
    %v89 = vld [vmem:[%s4] sm:$0x1]
    %v91 = vperm.slane %v88, 0
    %vm93 = vcmask 130048
    %v95 = vsel %vm93, %v43, 0
    %v98 = vsel %vm93, %v50, 0
    %v101 = vsel %vm93, %v57, 0
    %v104 = vsel %vm93, %v64, 0
    %v107 = vsel %vm93, %v71, 0
    %109 = vmatpush.xpose.msra.mxu0 0.0
    %110 = vmatpush.xpose.msra.mxu0 0.0
    %111 = vmatpush.xpose.msra.mxu0 0.0
    %112 = vmatpush.xpose.msra.mxu0 0.0
    %113 = vmatpush.xpose.msra.mxu0 0.0
    %114 = vmatpush.xpose.msra.mxu0 0.0
    %115 = vmatpush.xpose.msra.mxu0 0.0
    %116 = vmatpush.xpose.msra.mxu0 0.0
    %117 = vmatpush.xpose.msra.mxu0 0.0
    %118 = vmatpush.xpose.msra.mxu0 0.0
    %119 = vmatpush.xpose.msra.mxu0 0.0
    %120 = vmatpush.xpose.msra.mxu0 0.0
    %121 = vmatpush.xpose.msra.mxu0 %v65
    %122 = vmatpush.xpose.msra.mxu0 %v58
    %123 = vmatpush.xpose.msra.mxu0 %v51
    %124 = vmatpush.xpose.msra.mxu0 %v44
    %125 = vmatmul.f32.gmra.mxu0 %v37
    %v126 = vpop.f32.mrf.mxu0
    %v127 = vadd.f32 %v91, %v126
    %128 = vdwg.mxu0
    %129 = vmatpush.xpose.msra.mxu0 0.0
    %130 = vmatpush.xpose.msra.mxu0 0.0
    %131 = vmatpush.xpose.msra.mxu0 0.0
    %132 = vmatpush.xpose.msra.mxu0 0.0
    %133 = vmatpush.xpose.msra.mxu0 0.0
    %134 = vmatpush.xpose.msra.mxu0 0.0
    %135 = vmatpush.xpose.msra.mxu0 0.0
    %136 = vmatpush.xpose.msra.mxu0 0.0
    %137 = vmatpush.xpose.msra.mxu0 0.0
    %138 = vmatpush.xpose.msra.mxu0 0.0
    %139 = vmatpush.xpose.msra.mxu0 0.0
    %140 = vmatpush.xpose.msra.mxu0 0.0
    %141 = vmatpush.xpose.msra.mxu0 %v66
    %142 = vmatpush.xpose.msra.mxu0 %v59
    %143 = vmatpush.xpose.msra.mxu0 %v52
    %144 = vmatpush.xpose.msra.mxu0 %v45
    %145 = vmatmul.f32.gmra.mxu0 %v38
    %v146 = vpop.f32.mrf.mxu0
    %v147 = vadd.f32 %v127, %v146
    %148 = vdwg.mxu0
    %149 = vmatpush.xpose.msra.mxu0 0.0
    %150 = vmatpush.xpose.msra.mxu0 0.0
    %151 = vmatpush.xpose.msra.mxu0 0.0
    %152 = vmatpush.xpose.msra.mxu0 0.0
    %153 = vmatpush.xpose.msra.mxu0 0.0
    %154 = vmatpush.xpose.msra.mxu0 0.0
    %155 = vmatpush.xpose.msra.mxu0 0.0
    %156 = vmatpush.xpose.msra.mxu0 0.0
    %157 = vmatpush.xpose.msra.mxu0 0.0
    %158 = vmatpush.xpose.msra.mxu0 0.0
    %159 = vmatpush.xpose.msra.mxu0 0.0
    %160 = vmatpush.xpose.msra.mxu0 0.0
    %161 = vmatpush.xpose.msra.mxu0 %v67
    %162 = vmatpush.xpose.msra.mxu0 %v60
    %163 = vmatpush.xpose.msra.mxu0 %v53
    %164 = vmatpush.xpose.msra.mxu0 %v46
    %165 = vmatmul.f32.gmra.mxu0 %v39
    %v166 = vpop.f32.mrf.mxu0
    %v167 = vadd.f32 %v147, %v166
    %168 = vdwg.mxu0
    %169 = vmatpush.xpose.msra.mxu0 0.0
    %170 = vmatpush.xpose.msra.mxu0 0.0
    %171 = vmatpush.xpose.msra.mxu0 0.0
    %172 = vmatpush.xpose.msra.mxu0 0.0
    %173 = vmatpush.xpose.msra.mxu0 0.0
    %174 = vmatpush.xpose.msra.mxu0 0.0
    %175 = vmatpush.xpose.msra.mxu0 0.0
    %176 = vmatpush.xpose.msra.mxu0 0.0
    %177 = vmatpush.xpose.msra.mxu0 0.0
    %178 = vmatpush.xpose.msra.mxu0 0.0
    %179 = vmatpush.xpose.msra.mxu0 0.0
    %180 = vmatpush.xpose.msra.mxu0 0.0
    %181 = vmatpush.xpose.msra.mxu0 %v68
    %182 = vmatpush.xpose.msra.mxu0 %v61
    %183 = vmatpush.xpose.msra.mxu0 %v54
    %184 = vmatpush.xpose.msra.mxu0 %v47
    %185 = vmatmul.f32.gmra.mxu0 %v40
    %v186 = vpop.f32.mrf.mxu0
    %v187 = vadd.f32 %v167, %v186
    %188 = vdwg.mxu0
    %189 = vmatpush.xpose.msra.mxu0 0.0
    %190 = vmatpush.xpose.msra.mxu0 0.0
    %191 = vmatpush.xpose.msra.mxu0 0.0
    %192 = vmatpush.xpose.msra.mxu0 0.0
    %193 = vmatpush.xpose.msra.mxu0 0.0
    %194 = vmatpush.xpose.msra.mxu0 0.0
    %195 = vmatpush.xpose.msra.mxu0 0.0
    %196 = vmatpush.xpose.msra.mxu0 0.0
    %197 = vmatpush.xpose.msra.mxu0 0.0
    %198 = vmatpush.xpose.msra.mxu0 0.0
    %199 = vmatpush.xpose.msra.mxu0 0.0
    %200 = vmatpush.xpose.msra.mxu0 0.0
    %201 = vmatpush.xpose.msra.mxu0 %v69
    %202 = vmatpush.xpose.msra.mxu0 %v62
    %203 = vmatpush.xpose.msra.mxu0 %v55
    %204 = vmatpush.xpose.msra.mxu0 %v48
    %205 = vmatmul.f32.gmra.mxu0 %v41
    %v206 = vpop.f32.mrf.mxu0
    %v207 = vadd.f32 %v187, %v206
    %208 = vdwg.mxu0
    %209 = vmatpush.xpose.msra.mxu0 0.0
    %210 = vmatpush.xpose.msra.mxu0 0.0
    %211 = vmatpush.xpose.msra.mxu0 0.0
    %212 = vmatpush.xpose.msra.mxu0 0.0
    %213 = vmatpush.xpose.msra.mxu0 0.0
    %214 = vmatpush.xpose.msra.mxu0 0.0
    %215 = vmatpush.xpose.msra.mxu0 0.0
    %216 = vmatpush.xpose.msra.mxu0 0.0
    %217 = vmatpush.xpose.msra.mxu0 0.0
    %218 = vmatpush.xpose.msra.mxu0 0.0
    %219 = vmatpush.xpose.msra.mxu0 0.0
    %220 = vmatpush.xpose.msra.mxu0 0.0
    %221 = vmatpush.xpose.msra.mxu0 %v70
    %222 = vmatpush.xpose.msra.mxu0 %v63
    %223 = vmatpush.xpose.msra.mxu0 %v56
    %224 = vmatpush.xpose.msra.mxu0 %v49
    %225 = vmatmul.f32.gmra.mxu0 %v42
    %v226 = vpop.f32.mrf.mxu0
    %v227 = vadd.f32 %v207, %v226
    %228 = vdwg.mxu0
    %229 = vmatpush.xpose.msra.mxu0 0.0
    %230 = vmatpush.xpose.msra.mxu0 0.0
    %231 = vmatpush.xpose.msra.mxu0 0.0
    %232 = vmatpush.xpose.msra.mxu0 0.0
    %233 = vmatpush.xpose.msra.mxu0 0.0
    %234 = vmatpush.xpose.msra.mxu0 0.0
    %235 = vmatpush.xpose.msra.mxu0 0.0
    %236 = vmatpush.xpose.msra.mxu0 0.0
    %237 = vmatpush.xpose.msra.mxu0 0.0
    %238 = vmatpush.xpose.msra.mxu0 0.0
    %239 = vmatpush.xpose.msra.mxu0 0.0
    %240 = vmatpush.xpose.msra.mxu0 0.0
    %241 = vmatpush.xpose.msra.mxu0 %v107
    %242 = vmatpush.xpose.msra.mxu0 %v104
    %243 = vmatpush.xpose.msra.mxu0 %v101
    %244 = vmatpush.xpose.msra.mxu0 %v98
    %245 = vmatmul.f32.gmra.mxu0 %v95
    %v246 = vpop.f32.mrf.mxu0
    %v247 = vadd.f32 %v227, %v246
    %248 = vdwg.mxu0
    %v249 = vtanh.pop %v247
    %v251 = vperm.slane %v89, 0
    %vm253 = vcmask 261120
    %v255 = vsel %vm253, %v249, 0
    %v258 = vsel %vm253, %v72, 0
    %v261 = vsel %vm253, %v73, 0
    %v264 = vsel %vm253, %v74, 0
    %v267 = vsel %vm253, %v75, 0
    %v270 = vsel %vm253, %v76, 0
    %v273 = vsel %vm253, %v77, 0
    %v276 = vsel %vm253, %v78, 0
    %v279 = vsel %vm253, %v79, 0
    %v282 = vsel %vm253, %v80, 0
    %v285 = vsel %vm253, %v81, 0
    %v288 = vsel %vm253, %v82, 0
    %v291 = vsel %vm253, %v83, 0
    %v294 = vsel %vm253, %v84, 0
    %v297 = vsel %vm253, %v85, 0
    %v300 = vsel %vm253, %v86, 0
    %v303 = vsel %vm253, %v87, 0
    %305 = vmatpush.xpose.msra.mxu0 %v303
    %306 = vmatpush.xpose.msra.mxu0 %v300
    %307 = vmatpush.xpose.msra.mxu0 %v297
    %308 = vmatpush.xpose.msra.mxu0 %v294
    %309 = vmatpush.xpose.msra.mxu0 %v291
    %310 = vmatpush.xpose.msra.mxu0 %v288
    %311 = vmatpush.xpose.msra.mxu0 %v285
    %312 = vmatpush.xpose.msra.mxu0 %v282
    %313 = vmatpush.xpose.msra.mxu0 %v279
    %314 = vmatpush.xpose.msra.mxu0 %v276
    %315 = vmatpush.xpose.msra.mxu0 %v273
    %316 = vmatpush.xpose.msra.mxu0 %v270
    %317 = vmatpush.xpose.msra.mxu0 %v267
    %318 = vmatpush.xpose.msra.mxu0 %v264
    %319 = vmatpush.xpose.msra.mxu0 %v261
    %320 = vmatpush.xpose.msra.mxu0 %v258
    %321 = vmatmul.f32.gmra.mxu0 %v255
    %v322 = vpop.f32.mrf.mxu0
    %v323 = vadd.f32 %v251, %v322
    %324 = vdwg.mxu0
    %325 = vst [vmem:[#allocation5] sm:$0xff] %v323
    // Predicated region
    $region26: #{tpu_custom_call.1} parent=1 // pred_check
      _
    $region27: #{tpu_custom_call.1} parent=1 // pred_check_branch
      %327 = sbr.rel (0) target = $region29
    $region28: #{tpu_custom_call.1} parent=1 // pred_region
      %329 = vsyncadd [#allocation4], 0
      %s331 = sshll.u32 [#allocation5], 4
      %s332 = int_to_ptr.vmem [resolvable:$true] %s331
      %s333 = sshll.u32 %s5, 4
      %s334 = int_to_ptr.hbm [resolvable:$true] %s333
      %336 = dma.vmem_to_hbm [thread:$0]  %s332, 128, %s334, [#allocation4]
    $region29: #{tpu_custom_call.1} parent=1 // pred_fallthru
      _
    // Predicated region
    $region30: #{tpu_custom_call.1} parent=1 // pred_check
      _
    $region31: #{tpu_custom_call.1} parent=1 // pred_check_branch
      %338 = sbr.rel (0) target = $region33
    $region32: #{tpu_custom_call.1} parent=1 // pred_region
      %340 = dma.done [#allocation4], 128
    $region33: #{tpu_custom_call.1} parent=1 // pred_fallthru
      _
    %341 = vsyncpa [#allocation3], 1
    %342 = vsyncpa [#allocation4], 1

</llo_original>
